<compile_context>
chip_gen: v5e
topology: v5e:2x2
jax: 0.10.0
libtpu: 0.0.40
codegen_flags: <defaults>
</compile_context>

<pallas_src>
import jax
import jax.numpy as jnp
from jax import lax
from jax.experimental import pallas as pl
from jax.experimental.pallas import tpu as pltpu

LANE = 128
SUBLANE = 8


# ------------------------------------------------------------------ kernels ---

def _make_spike_kernel(T: int, Tp: int, chunk: int):
    """IF forward for T > 0.  x_ref/o_ref: (T, tile_rows, 128) VMEM blocks.

    The temporal recurrence runs per vreg-sized row chunk so the carries
    (mem / flag / membrane_lower) stay register-resident for all T+Tp steps
    instead of streaming through VMEM each timestep.
    """

    def kernel(thresh_ref, x_ref, o_ref):
        thre = thresh_ref[0]                      # scalar (f32) from SMEM
        tile_rows = x_ref.shape[1]
        n_chunks = tile_rows // chunk

        # Hoisted scalar->tile broadcasts (JAX does not CSE broadcast_in_dim).
        thre_b = jnp.full((chunk, LANE), thre, jnp.float32)
        neg_thre_b = jnp.full((chunk, LANE), -thre, jnp.float32)
        half_thre_b = jnp.full((chunk, LANE), 0.5 * thre, jnp.float32)
        zero_b = jnp.zeros((chunk, LANE), jnp.float32)
        eps_b = jnp.full((chunk, LANE), 0.001, jnp.float32)

        def chunk_body(c, carry):
            r0 = pl.multiple_of(c * chunk, chunk)
            mem = half_thre_b
            flag = zero_b
            membrane_lower = None                 # only materialized when Tp > 0
            # T + Tp is small & static -> unrolled temporal recurrence on vregs.
            for t in range(T + Tp):
                idx = (t - Tp) if t >= Tp else t
                mem = mem + x_ref[idx, pl.ds(r0, chunk), :].astype(jnp.float32)
                # ZIF.forward(mem - thre) * thre  ->  select(mem >= thre, thre, 0)
                posspike = jnp.where(mem >= thre_b, thre_b, zero_b)
                # mem.le(-thre)*(-thre) * (flag > 0), fused into one select
                negspike = jnp.where((mem <= neg_thre_b) & (flag > zero_b),
                                     neg_thre_b, zero_b)
                spike = posspike + negspike
                mem = mem - spike
                flag = flag + spike
                if t == Tp - 1:
                    membrane_lower = mem > eps_b
                    mem = half_thre_b
                if t >= Tp:
                    out = spike if Tp == 0 else jnp.where(membrane_lower, spike, zero_b)
                    o_ref[t - Tp, pl.ds(r0, chunk), :] = out.astype(o_ref.dtype)
            return carry

        lax.fori_loop(0, n_chunks, chunk_body, 0)

    return kernel


def _quant_kernel(scal_ref, x_ref, o_ref):
    """IF forward for T == 0 (clamp + floor quantization).  x/o: (tile_rows, 128).

    scal_ref (SMEM, f32[2]) = [thresh, L]
    out = floor(clip(x/thre, 0, 1) * L + 0.5) / L * thre    (exact module math)
    """
    thre = scal_ref[0]
    l_f = scal_ref[1]
    x = x_ref[...].astype(jnp.float32)
    y = x / thre
    y = jnp.clip(y, 0.0, 1.0)
    y = jnp.floor(y * l_f + 0.5) / l_f
    o_ref[...] = (y * thre).astype(o_ref.dtype)


# ------------------------------------------------------------------ helpers ---

def _num_tensorcores() -> int:
    """2 TensorCores only on v7x; v5e/v6e are single-TC."""
    try:
        kind = jax.devices()[0].device_kind.lower()
    except Exception:
        return 1
    return 2 if ("v7" in kind or "7x" in kind) else 1


def _round_up(v: int, m: int) -> int:
    return -(-v // m) * m


def _pad_flat(x_flat):
    """Pad last dim up to a multiple of 8*128 — only if needed (no copy when aligned)."""
    n = x_flat.shape[-1]
    align = SUBLANE * LANE
    npad = _round_up(n, align)
    if npad != n:
        pad = [(0, 0)] * (x_flat.ndim - 1) + [(0, npad - n)]
        x_flat = jnp.pad(x_flat, pad)
    return x_flat, npad, n


def _choose_tile_rows(rows: int, budget_rows: int, num_tc: int) -> int:
    """Pick a tile row count (multiple of 8, <= budget).  No divisibility
    requirement: the grid uses cdiv and the last block may be partial."""
    budget_rows = max(SUBLANE, (budget_rows // SUBLANE) * SUBLANE)
    if rows <= budget_rows:
        # Whole tensor fits one block.  Only split for megacore (2 TCs).
        if num_tc >= 2 and rows >= 2 * SUBLANE:
            return _round_up(-(-rows // 2), SUBLANE)
        return rows
    tile = budget_rows
    steps = -(-rows // tile)
    if num_tc >= 2 and steps > 1 and steps % 2 == 1:
        # Nudge to an even step count so both TensorCores stay busy.
        steps += 1
        tile = max(SUBLANE, _round_up(-(-rows // steps), SUBLANE))
    return tile


# ------------------------------------------------------------------ wrapper ---

def if_forward(x, thresh, *, T=0, Tp=0, L=8, gama=1.0, block_bytes=4 << 20):
    """Forward pass of the PyTorch IF module (forward semantics only)."""
    # TODO(synk): ZIF / GradFloor surrogate gradients are autograd-only (backward);
    # only the forward pass is implemented here.
    del gama  # backward-only parameter
    thre = jnp.asarray(thresh, jnp.float32).reshape(())
    orig_shape = x.shape
    if not jnp.issubdtype(x.dtype, jnp.floating):
        x = x.astype(jnp.float32)
    dtype = x.dtype
    itemsize = int(jnp.dtype(dtype).itemsize)
    num_tc = _num_tensorcores()

    if T > 0:
        assert orig_shape[0] % T == 0, "leading dim must be divisible by T"
        per_step = 1
        for d in orig_shape:
            per_step *= int(d)
        per_step //= T
        x_flat = x.reshape(T, per_step)                      # ExpandTemporalDim + flatten (views)
        x_flat, npad, n = _pad_flat(x_flat)
        rows = npad // LANE
        budget_rows = max(SUBLANE, block_bytes // (T * LANE * itemsize))
        tile_rows = _choose_tile_rows(rows, budget_rows, num_tc)
        chunk = 16 if tile_rows % 16 == 0 else SUBLANE
        grid = (pl.cdiv(rows, tile_rows),)
        x3 = x_flat.reshape(T, rows, LANE)                   # free view

        block_bytes_actual = T * tile_rows * LANE * itemsize
        vmem_limit = int(min(48 << 20,
                             max(32 << 20, 4 * block_bytes_actual + (4 << 20))))
        cost = pl.CostEstimate(flops=int(10 * (T + Tp) * npad),
                               transcendentals=0,
                               bytes_accessed=int(2 * T * npad * itemsize))

        out = pl.pallas_call(
            _make_spike_kernel(T, Tp, chunk),
            out_shape=jax.ShapeDtypeStruct((T, rows, LANE), dtype),
            grid=grid,
            in_specs=[
                pl.BlockSpec(memory_space=pltpu.MemorySpace.SMEM),         # thresh scalar
                pl.BlockSpec((T, tile_rows, LANE), lambda i: (0, i, 0)),   # x
            ],
            out_specs=pl.BlockSpec((T, tile_rows, LANE), lambda i: (0, i, 0)),
            compiler_params=pltpu.CompilerParams(
                dimension_semantics=("parallel",),
                vmem_limit_bytes=vmem_limit),
            cost_estimate=cost,
        )(thre.reshape((1,)), x3)

        out = out.reshape(T, npad)
        if npad != n:
            out = out[:, :n]
        return out.reshape(orig_shape)                       # MergeTemporalDim
    else:
        x_flat, npad, n = _pad_flat(x.reshape(-1))
        rows = npad // LANE
        budget_rows = max(SUBLANE, block_bytes // (LANE * itemsize))
        tile_rows = _choose_tile_rows(rows, budget_rows, num_tc)
        grid = (pl.cdiv(rows, tile_rows),)
        x2 = x_flat.reshape(rows, LANE)

        scal = jnp.stack([thre, jnp.asarray(float(L), jnp.float32)])
        block_bytes_actual = tile_rows * LANE * itemsize
        vmem_limit = int(min(48 << 20,
                             max(32 << 20, 4 * block_bytes_actual + (4 << 20))))
        cost = pl.CostEstimate(flops=int(6 * npad),
                               transcendentals=int(npad),
                               bytes_accessed=int(2 * npad * itemsize))

        out = pl.pallas_call(
            _quant_kernel,
            out_shape=jax.ShapeDtypeStruct((rows, LANE), dtype),
            grid=grid,
            in_specs=[
                pl.BlockSpec(memory_space=pltpu.MemorySpace.SMEM),         # [thresh, L]
                pl.BlockSpec((tile_rows, LANE), lambda i: (i, 0)),
            ],
            out_specs=pl.BlockSpec((tile_rows, LANE), lambda i: (i, 0)),
            compiler_params=pltpu.CompilerParams(
                dimension_semantics=("parallel",),
                vmem_limit_bytes=vmem_limit),
            cost_estimate=cost,
        )(scal, x2)

        out = out.reshape(-1)
        if npad != n:
            out = out[:n]
        return out.reshape(orig_shape)


# ---------------------------------------------------------- pure-JAX reference ---

def _ref_spike(x, thresh, T, Tp):
    B = x.shape[0] // T
    xs = x.reshape((T, B) + x.shape[1:]).astype(jnp.float32)
    thre = jnp.float32(thresh)
    mem = 0.5 * thre * jnp.ones_like(xs[0])
    flag = jnp.zeros_like(xs[0])
    ml = jnp.ones_like(xs[0])
    outs = []
    for t in range(T + Tp):
        idx = (t - Tp) if t >= Tp else t
        mem = mem + xs[idx]
        pos = (mem - thre >= 0).astype(jnp.float32) * thre
        neg = (mem <= -thre).astype(jnp.float32) * (-thre)
        comp = (flag > 0).astype(jnp.float32)
        spike = pos + neg * comp
        mem = mem - spike
        flag = flag + spike
        if t == Tp - 1:
            ml = (mem > 0.001).astype(jnp.float32)
            mem = 0.5 * thre * jnp.ones_like(mem)
        if t >= Tp:
            outs.append(spike * ml)
    return jnp.stack(outs, 0).reshape(x.shape)


def _ref_quant(x, thresh, L):
    y = x.astype(jnp.float32) / thresh
    y = jnp.clip(y, 0.0, 1.0)
    y = jnp.floor(y * L + 0.5) / L
    return y * thresh


# --------------------------------------------------------------------- main ---

if __name__ == "__main__":
    key = jax.random.PRNGKey(0)
    k1, k2, k3, k4, k5, k6 = jax.random.split(key, 6)

    # Deterministic "parameter" init (module __init__: thresh = tensor([8.0])).
    thresh = jnp.array([8.0], dtype=jnp.float32)
    L, gama = 8, 1.0

    # ---- T > 0 (spiking) branch, lane-aligned shape: x is (T*B, C, H, W) ----
    T, Tp = 4, 2
    B, C, H, W = 2, 4, 16, 16
    x_spk = 6.0 * jax.random.normal(k1, (T * B, C, H, W), dtype=jnp.float32)
    out_spk = jax.block_until_ready(if_forward(x_spk, thresh, T=T, Tp=Tp, L=L, gama=gama))
    ref_spk = _ref_spike(x_spk, 8.0, T, Tp)
    assert out_spk.shape == x_spk.shape
    assert jnp.allclose(out_spk, ref_spk, atol=1e-5), "spiking branch mismatch"

    # ---- T == 0 (quantization) branch, lane-aligned shape ----
    x_q = 10.0 * jax.random.normal(k2, (B, C, H, W), dtype=jnp.float32)
    out_q = jax.block_until_ready(if_forward(x_q, thresh, T=0, Tp=0, L=L, gama=gama))
    ref_q = _ref_quant(x_q, 8.0, L)
    assert out_q.shape == x_q.shape
    assert jnp.allclose(out_q, ref_q, atol=1e-5), "quantization branch mismatch"

    # ---- ragged (non-128-aligned) shapes to exercise the pad path ----
    x_spk2 = 6.0 * jax.random.normal(k3, (4 * 1, 3, 7, 5), dtype=jnp.float32)
    out_spk2 = jax.block_until_ready(if_forward(x_spk2, thresh, T=4, Tp=0, L=L, gama=gama))
    assert jnp.allclose(out_spk2, _ref_spike(x_spk2, 8.0, 4, 0), atol=1e-5), \
        "ragged spiking branch mismatch"

    x_q2 = 10.0 * jax.random.normal(k4, (2, 3, 7, 5), dtype=jnp.float32)
    out_q2 = jax.block_until_ready(if_forward(x_q2, thresh, T=0, Tp=0, L=L, gama=gama))
    assert jnp.allclose(out_q2, _ref_quant(x_q2, 8.0, L), atol=1e-5), \
        "ragged quantization branch mismatch"

    # ---- non-divisible tiling (partial last block via cdiv grid) ----
    # spike: rows=24, forced tile_rows=16 -> grid cdiv(24,16)=2 with partial block
    x_spk3 = 6.0 * jax.random.normal(k5, (2 * 1, 3, 32, 32), dtype=jnp.float32)
    out_spk3 = jax.block_until_ready(
        if_forward(x_spk3, thresh, T=2, Tp=1, L=L, gama=gama, block_bytes=2 * 16 * LANE * 4))
    assert jnp.allclose(out_spk3, _ref_spike(x_spk3, 8.0, 2, 1), atol=1e-5), \
        "partial-block spiking branch mismatch"

    # quant: rows=40, forced tile_rows<=16 -> partial last block
    x_q3 = 10.0 * jax.random.normal(k6, (2, 4, 20, 32), dtype=jnp.float32)
    out_q3 = jax.block_until_ready(
        if_forward(x_q3, thresh, T=0, Tp=0, L=L, gama=gama, block_bytes=16 * LANE * 4))
    assert jnp.allclose(out_q3, _ref_quant(x_q3, 8.0, L), atol=1e-5), \
        "partial-block quantization branch mismatch"

    print("KERNEL_OK")
</pallas_src>

<mosaic_0001>
module attributes {stable_mosaic.version = 11 : i64} {
  func.func @kernel(%arg0: i32, %arg1: memref<1xf32, #tpu.memory_space<smem>>, %arg2: memref<4x16x128xf32, #tpu.memory_space<vmem>>, %arg3: memref<4x16x128xf32, #tpu.memory_space<vmem>>) attributes {dimension_semantics = [#tpu.dimension_semantics<parallel>], iteration_bounds = array<i64: 1>, scalar_prefetch = 0 : i64, scratch_operands = 0 : i64, tpu.core_type = #tpu.core_type<tc>, window_params = [{transform_indices = @transform_0, window_bounds = array<i64: 1>}, {transform_indices = @transform_1, window_bounds = array<i64: 4, 16, 128>}, {transform_indices = @transform_2, window_bounds = array<i64: 4, 16, 128>}]} {
    %c0 = arith.constant 0 : index
    %0 = memref.load %arg1[%c0] : memref<1xf32, #tpu.memory_space<smem>>
    %1 = vector.broadcast %0 : f32 to vector<16x128xf32>
    %cst = arith.constant 0.000000e+00 : f32
    %2 = arith.subf %cst, %0 : f32
    %3 = vector.broadcast %2 : f32 to vector<16x128xf32>
    %cst_0 = arith.constant 5.000000e-01 : f32
    %4 = arith.mulf %cst_0, %0 : f32
    %5 = vector.broadcast %4 : f32 to vector<16x128xf32>
    %cst_1 = arith.constant 0.000000e+00 : f32
    %6 = vector.broadcast %cst_1 : f32 to vector<16x128xf32>
    %cst_2 = arith.constant 1.000000e-03 : f32
    %7 = vector.broadcast %cst_2 : f32 to vector<16x128xf32>
    %c0_i32 = arith.constant 0 : i32
    %c16_i32 = arith.constant 16 : i32
    %8 = arith.muli %c0_i32, %c16_i32 : i32
    %9 = tpu.assume_multiple %8, 16 : i32
    %c0_3 = arith.constant 0 : index
    %10 = arith.index_cast %9 : i32 to index
    %c0_4 = arith.constant 0 : index
    %11 = vector.load %arg2[%c0_3, %10, %c0_4] : memref<4x16x128xf32, #tpu.memory_space<vmem>>, vector<1x16x128xf32>
    %12 = vector.shape_cast %11 : vector<1x16x128xf32> to vector<16x128xf32>
    %13 = arith.addf %5, %12 : vector<16x128xf32>
    %14 = arith.cmpf oge, %13, %1 : vector<16x128xf32>
    %15 = arith.select %14, %1, %6 : vector<16x128xi1>, vector<16x128xf32>
    %16 = arith.cmpf ole, %13, %3 : vector<16x128xf32>
    %17 = arith.cmpf ogt, %6, %6 : vector<16x128xf32>
    %18 = arith.andi %16, %17 : vector<16x128xi1>
    %19 = arith.select %18, %3, %6 : vector<16x128xi1>, vector<16x128xf32>
    %20 = arith.addf %15, %19 : vector<16x128xf32>
    %21 = arith.subf %13, %20 : vector<16x128xf32>
    %22 = arith.addf %6, %20 : vector<16x128xf32>
    %c1 = arith.constant 1 : index
    %23 = arith.index_cast %9 : i32 to index
    %c0_5 = arith.constant 0 : index
    %24 = vector.load %arg2[%c1, %23, %c0_5] : memref<4x16x128xf32, #tpu.memory_space<vmem>>, vector<1x16x128xf32>
    %25 = vector.shape_cast %24 : vector<1x16x128xf32> to vector<16x128xf32>
    %26 = arith.addf %21, %25 : vector<16x128xf32>
    %27 = arith.cmpf oge, %26, %1 : vector<16x128xf32>
    %28 = arith.select %27, %1, %6 : vector<16x128xi1>, vector<16x128xf32>
    %29 = arith.cmpf ole, %26, %3 : vector<16x128xf32>
    %30 = arith.cmpf ogt, %22, %6 : vector<16x128xf32>
    %31 = arith.andi %29, %30 : vector<16x128xi1>
    %32 = arith.select %31, %3, %6 : vector<16x128xi1>, vector<16x128xf32>
    %33 = arith.addf %28, %32 : vector<16x128xf32>
    %34 = arith.subf %26, %33 : vector<16x128xf32>
    %35 = arith.addf %22, %33 : vector<16x128xf32>
    %36 = arith.cmpf ogt, %34, %7 : vector<16x128xf32>
    %c0_6 = arith.constant 0 : index
    %37 = arith.index_cast %9 : i32 to index
    %c0_7 = arith.constant 0 : index
    %38 = vector.load %arg2[%c0_6, %37, %c0_7] : memref<4x16x128xf32, #tpu.memory_space<vmem>>, vector<1x16x128xf32>
    %39 = vector.shape_cast %38 : vector<1x16x128xf32> to vector<16x128xf32>
    %40 = arith.addf %5, %39 : vector<16x128xf32>
    %41 = arith.cmpf oge, %40, %1 : vector<16x128xf32>
    %42 = arith.select %41, %1, %6 : vector<16x128xi1>, vector<16x128xf32>
    %43 = arith.cmpf ole, %40, %3 : vector<16x128xf32>
    %44 = arith.cmpf ogt, %35, %6 : vector<16x128xf32>
    %45 = arith.andi %43, %44 : vector<16x128xi1>
    %46 = arith.select %45, %3, %6 : vector<16x128xi1>, vector<16x128xf32>
    %47 = arith.addf %42, %46 : vector<16x128xf32>
    %48 = arith.subf %40, %47 : vector<16x128xf32>
    %49 = arith.addf %35, %47 : vector<16x128xf32>
    %50 = arith.select %36, %47, %6 : vector<16x128xi1>, vector<16x128xf32>
    %c0_8 = arith.constant 0 : index
    %51 = arith.index_cast %9 : i32 to index
    %c0_9 = arith.constant 0 : index
    %52 = vector.load %arg3[%c0_8, %51, %c0_9] : memref<4x16x128xf32, #tpu.memory_space<vmem>>, vector<1x16x128xf32>
    %53 = vector.shape_cast %52 : vector<1x16x128xf32> to vector<16x128xf32>
    %54 = vector.shape_cast %50 : vector<16x128xf32> to vector<1x16x128xf32>
    tpu.vector_store %arg3[%c0_8, %51, %c0_9], %54 {strides = array<i32>} : memref<4x16x128xf32, #tpu.memory_space<vmem>>, vector<1x16x128xf32>,
    %c1_10 = arith.constant 1 : index
    %55 = arith.index_cast %9 : i32 to index
    %c0_11 = arith.constant 0 : index
    %56 = vector.load %arg2[%c1_10, %55, %c0_11] : memref<4x16x128xf32, #tpu.memory_space<vmem>>, vector<1x16x128xf32>
    %57 = vector.shape_cast %56 : vector<1x16x128xf32> to vector<16x128xf32>
    %58 = arith.addf %48, %57 : vector<16x128xf32>
    %59 = arith.cmpf oge, %58, %1 : vector<16x128xf32>
    %60 = arith.select %59, %1, %6 : vector<16x128xi1>, vector<16x128xf32>
    %61 = arith.cmpf ole, %58, %3 : vector<16x128xf32>
    %62 = arith.cmpf ogt, %49, %6 : vector<16x128xf32>
    %63 = arith.andi %61, %62 : vector<16x128xi1>
    %64 = arith.select %63, %3, %6 : vector<16x128xi1>, vector<16x128xf32>
    %65 = arith.addf %60, %64 : vector<16x128xf32>
    %66 = arith.subf %58, %65 : vector<16x128xf32>
    %67 = arith.addf %49, %65 : vector<16x128xf32>
    %68 = arith.select %36, %65, %6 : vector<16x128xi1>, vector<16x128xf32>
    %c1_12 = arith.constant 1 : index
    %69 = arith.index_cast %9 : i32 to index
    %c0_13 = arith.constant 0 : index
    %70 = vector.load %arg3[%c1_12, %69, %c0_13] : memref<4x16x128xf32, #tpu.memory_space<vmem>>, vector<1x16x128xf32>
    %71 = vector.shape_cast %70 : vector<1x16x128xf32> to vector<16x128xf32>
    %72 = vector.shape_cast %68 : vector<16x128xf32> to vector<1x16x128xf32>
    tpu.vector_store %arg3[%c1_12, %69, %c0_13], %72 {strides = array<i32>} : memref<4x16x128xf32, #tpu.memory_space<vmem>>, vector<1x16x128xf32>,
    %c2 = arith.constant 2 : index
    %73 = arith.index_cast %9 : i32 to index
    %c0_14 = arith.constant 0 : index
    %74 = vector.load %arg2[%c2, %73, %c0_14] : memref<4x16x128xf32, #tpu.memory_space<vmem>>, vector<1x16x128xf32>
    %75 = vector.shape_cast %74 : vector<1x16x128xf32> to vector<16x128xf32>
    %76 = arith.addf %66, %75 : vector<16x128xf32>
    %77 = arith.cmpf oge, %76, %1 : vector<16x128xf32>
    %78 = arith.select %77, %1, %6 : vector<16x128xi1>, vector<16x128xf32>
    %79 = arith.cmpf ole, %76, %3 : vector<16x128xf32>
    %80 = arith.cmpf ogt, %67, %6 : vector<16x128xf32>
    %81 = arith.andi %79, %80 : vector<16x128xi1>
    %82 = arith.select %81, %3, %6 : vector<16x128xi1>, vector<16x128xf32>
    %83 = arith.addf %78, %82 : vector<16x128xf32>
    %84 = arith.subf %76, %83 : vector<16x128xf32>
    %85 = arith.addf %67, %83 : vector<16x128xf32>
    %86 = arith.select %36, %83, %6 : vector<16x128xi1>, vector<16x128xf32>
    %c2_15 = arith.constant 2 : index
    %87 = arith.index_cast %9 : i32 to index
    %c0_16 = arith.constant 0 : index
    %88 = vector.load %arg3[%c2_15, %87, %c0_16] : memref<4x16x128xf32, #tpu.memory_space<vmem>>, vector<1x16x128xf32>
    %89 = vector.shape_cast %88 : vector<1x16x128xf32> to vector<16x128xf32>
    %90 = vector.shape_cast %86 : vector<16x128xf32> to vector<1x16x128xf32>
    tpu.vector_store %arg3[%c2_15, %87, %c0_16], %90 {strides = array<i32>} : memref<4x16x128xf32, #tpu.memory_space<vmem>>, vector<1x16x128xf32>,
    %c3 = arith.constant 3 : index
    %91 = arith.index_cast %9 : i32 to index
    %c0_17 = arith.constant 0 : index
    %92 = vector.load %arg2[%c3, %91, %c0_17] : memref<4x16x128xf32, #tpu.memory_space<vmem>>, vector<1x16x128xf32>
    %93 = vector.shape_cast %92 : vector<1x16x128xf32> to vector<16x128xf32>
    %94 = arith.addf %84, %93 : vector<16x128xf32>
    %95 = arith.cmpf oge, %94, %1 : vector<16x128xf32>
    %96 = arith.select %95, %1, %6 : vector<16x128xi1>, vector<16x128xf32>
    %97 = arith.cmpf ole, %94, %3 : vector<16x128xf32>
    %98 = arith.cmpf ogt, %85, %6 : vector<16x128xf32>
    %99 = arith.andi %97, %98 : vector<16x128xi1>
    %100 = arith.select %99, %3, %6 : vector<16x128xi1>, vector<16x128xf32>
    %101 = arith.addf %96, %100 : vector<16x128xf32>
    %102 = arith.select %36, %101, %6 : vector<16x128xi1>, vector<16x128xf32>
    %c3_18 = arith.constant 3 : index
    %103 = arith.index_cast %9 : i32 to index
    %c0_19 = arith.constant 0 : index
    %104 = vector.load %arg3[%c3_18, %103, %c0_19] : memref<4x16x128xf32, #tpu.memory_space<vmem>>, vector<1x16x128xf32>
    %105 = vector.shape_cast %104 : vector<1x16x128xf32> to vector<16x128xf32>
    %106 = vector.shape_cast %102 : vector<16x128xf32> to vector<1x16x128xf32>
    tpu.vector_store %arg3[%c3_18, %103, %c0_19], %106 {strides = array<i32>} : memref<4x16x128xf32, #tpu.memory_space<vmem>>, vector<1x16x128xf32>,
    %c1_i32 = arith.constant 1 : i32
    return
  }
  func.func @transform_0(%arg0: i32) -> i32 {
    %c0_i32 = arith.constant 0 : i32
    %c0_i32_0 = arith.constant 0 : i32
    return %c0_i32 : i32
  }
  func.func @transform_1(%arg0: i32) -> (i32, i32, i32) {
    %c0_i32 = arith.constant 0 : i32
    %c0_i32_0 = arith.constant 0 : i32
    %c0_i32_1 = arith.constant 0 : i32
    return %c0_i32, %arg0, %c0_i32_0 : i32, i32, i32
  }
  func.func @transform_2(%arg0: i32) -> (i32, i32, i32) {
    %c0_i32 = arith.constant 0 : i32
    %c0_i32_0 = arith.constant 0 : i32
    %c0_i32_1 = arith.constant 0 : i32
    return %c0_i32, %arg0, %c0_i32_0 : i32, i32, i32
  }
}

</mosaic_0001>

<llo_original>
// kernel: tpu_custom_call.1
$region0: #{tpu_custom_call.1}
  #allocation0 [shape = 'u32[]', space=smem, size = 0x4, offset = 0x4, fixed_abs, tag = 'smem constant byte address 0x4 - core index']
  #allocation1 [shape = 'u32[72,128]{1,0:T(1,128)}', space=vmem, size = 0x9000, scoped, tag = 'internal scratch']
  #allocation2 [shape = 'f32[1]{0:T(128)S(6)}', space=smem, size = 0x200, scoped, tag = 'scoped memory for tpu_custom_call.1']
  %s0 = inlined_call_operand.<no memory space> [shape: f32[1], index: 0, kind: input, shape index: {}]
  %s1 = inlined_call_operand.hbm [shape: f32[4,16,128], index: 1, kind: input, shape index: {}]
  %s2 = inlined_call_operand.hbm [shape: f32[4,16,128], index: 2, kind: output, shape index: {}]
  %s3 = sld [smem:[#allocation0]]
  $region22: #{tpu_custom_call.1} parent=0
    _
  %s5 = ssub.s32 1, %s3
  %s6 = scalar_select 0, %s5, %s3
  %7 = sst [smem:[#allocation2]] %s0
  $region1: #{tpu_custom_call.1} parent=0
    #allocation3 [shape = 'u8[32768]{0}', space=vmem, size = 0x8000, scoped, tag = 'input window, operand 1, single buffered']
    #allocation4 [shape = 's32[1]{0}', space=sflag, size = 0x4, scoped, tag = 'scoped memory for tpu_custom_call.1']
    #allocation5 [shape = 's32[1]{0}', space=sflag, size = 0x4, scoped, tag = 'scoped memory for tpu_custom_call.1']
    #allocation6 [shape = 'u8[32768]{0}', space=vmem, size = 0x8000, scoped, tag = 'output window, operand 0, single buffered']
    %8 = vsyncpa [#allocation4], 0
    %9 = vsyncpa [#allocation5], 0
    // Predicated region
    $region2: #{tpu_custom_call.1} parent=1 // pred_check
      _
    $region3: #{tpu_custom_call.1} parent=1 // pred_check_branch
      %11 = sbr.rel (0) target = $region5
    $region4: #{tpu_custom_call.1} parent=1 // pred_region
      _
    $region5: #{tpu_custom_call.1} parent=1 // pred_fallthru
      _
    // Predicated region
    $region6: #{tpu_custom_call.1} parent=1 // pred_check
      _
    $region7: #{tpu_custom_call.1} parent=1 // pred_check_branch
      %13 = sbr.rel (0) target = $region9
    $region8: #{tpu_custom_call.1} parent=1 // pred_region
      %15 = vsyncadd [#allocation4], 0
      %s16 = sshll.u32 %s1, 4
      %s17 = int_to_ptr.hbm [resolvable:$true] %s16
      %s18 = sshll.u32 [#allocation3], 4
      %s19 = int_to_ptr.vmem [resolvable:$true] %s18
      %24 = dma.hbm_to_vmem [thread:$0]  %s17, 1024, %s19, [#allocation4], 128, 128, 8
    $region9: #{tpu_custom_call.1} parent=1 // pred_fallthru
      _
    // Predicated region
    $region10: #{tpu_custom_call.1} parent=1 // pred_check
      _
    $region11: #{tpu_custom_call.1} parent=1 // pred_check_branch
      %26 = sbr.rel (0) target = $region13
    $region12: #{tpu_custom_call.1} parent=1 // pred_region
      %28 = dma.done [#allocation4], 1024
    $region13: #{tpu_custom_call.1} parent=1 // pred_fallthru
      _
    %s29 = sld [smem:[#allocation2]]
    %v30 = vstv %s29
    %s31 = ssub.f32 0.0, %s29
    %v32 = vstv %s31
    %s33 = smul.f32 %s29, 0.5
    %v34 = vstv %s33
    %v35 = vld [vmem:[#allocation3] sm:$0xff]
    %v36 = vld [vmem:[#allocation3 + $0x8] sm:$0xff]
    %v37 = vadd.f32 %v34, %v35
    %v38 = vadd.f32 %v34, %v36
    %vm39 = vcmp.ge.f32.partialorder %v37, %v30
    %vm40 = vcmp.ge.f32.partialorder %v38, %v30
    %v41 = vsel %vm39, %v30, 0.0
    %v42 = vsel %vm40, %v30, 0.0
    %vm43 = vcmp.le.f32.partialorder %v37, %v32
    %vm44 = vcmp.le.f32.partialorder %v38, %v32
    %vm45 = vcmp.gt.f32.partialorder 0.0, 0.0
    %vm46 = vmand %vm43, %vm45
    %vm47 = vmand %vm44, %vm45
    %v48 = vsel %vm46, %v32, 0.0
    %v49 = vsel %vm47, %v32, 0.0
    %v50 = vadd.f32 %v41, %v48
    %v51 = vadd.f32 %v42, %v49
    %v52 = vsub.f32 %v37, %v50
    %v53 = vsub.f32 %v38, %v51
    %v54 = vadd.f32 %v50, 0.0
    %v55 = vadd.f32 %v51, 0.0
    %s56 = sadd.s32 0, 16
    %s57 = scalar_lea.vmem [#allocation3], %s56
    %v58 = vld [vmem:[%s57] sm:$0xff]
    %v59 = vld [vmem:[%s57 + $0x8] sm:$0xff]
    %v60 = vadd.f32 %v52, %v58
    %v61 = vadd.f32 %v53, %v59
    %vm62 = vcmp.ge.f32.partialorder %v60, %v30
    %vm63 = vcmp.ge.f32.partialorder %v61, %v30
    %v64 = vsel %vm62, %v30, 0.0
    %v65 = vsel %vm63, %v30, 0.0
    %vm66 = vcmp.le.f32.partialorder %v60, %v32
    %vm67 = vcmp.le.f32.partialorder %v61, %v32
    %vm68 = vcmp.gt.f32.partialorder %v54, 0.0
    %vm69 = vcmp.gt.f32.partialorder %v55, 0.0
    %vm70 = vmand %vm66, %vm68
    %vm71 = vmand %vm67, %vm69
    %v72 = vsel %vm70, %v32, 0.0
    %v73 = vsel %vm71, %v32, 0.0
    %v74 = vadd.f32 %v64, %v72
    %v75 = vadd.f32 %v65, %v73
    %v76 = vsub.f32 %v60, %v74
    %v77 = vsub.f32 %v61, %v75
    %v78 = vadd.f32 %v54, %v74
    %v79 = vadd.f32 %v55, %v75
    %vm80 = vcmp.gt.f32.partialorder %v76, 0.001
    %vm81 = vcmp.gt.f32.partialorder %v77, 0.001
    %vm82 = vcmp.gt.f32.partialorder %v78, 0.0
    %vm83 = vcmp.gt.f32.partialorder %v79, 0.0
    %vm84 = vmand %vm43, %vm82
    %vm85 = vmand %vm44, %vm83
    %v86 = vsel %vm84, %v32, 0.0
    %v87 = vsel %vm85, %v32, 0.0
    %v88 = vadd.f32 %v41, %v86
    %v89 = vadd.f32 %v42, %v87
    %v90 = vsub.f32 %v37, %v88
    %v91 = vsub.f32 %v38, %v89
    %v92 = vadd.f32 %v78, %v88
    %v93 = vadd.f32 %v79, %v89
    %v94 = vsel %vm80, %v88, 0.0
    %v95 = vsel %vm81, %v89, 0.0
    %96 = vst [vmem:[#allocation6] sm:$0xff] %v94
    %97 = vst [vmem:[#allocation6 + $0x8] sm:$0xff] %v95
    %v98 = vld [vmem:[%s57] sm:$0xff]
    %v99 = vld [vmem:[%s57 + $0x8] sm:$0xff]
    %v100 = vadd.f32 %v90, %v98
    %v101 = vadd.f32 %v91, %v99
    %vm102 = vcmp.ge.f32.partialorder %v100, %v30
    %vm103 = vcmp.ge.f32.partialorder %v101, %v30
    %v104 = vsel %vm102, %v30, 0.0
    %v105 = vsel %vm103, %v30, 0.0
    %vm106 = vcmp.le.f32.partialorder %v100, %v32
    %vm107 = vcmp.le.f32.partialorder %v101, %v32
    %vm108 = vcmp.gt.f32.partialorder %v92, 0.0
    %vm109 = vcmp.gt.f32.partialorder %v93, 0.0
    %vm110 = vmand %vm106, %vm108
    %vm111 = vmand %vm107, %vm109
    %v112 = vsel %vm110, %v32, 0.0
    %v113 = vsel %vm111, %v32, 0.0
    %v114 = vadd.f32 %v104, %v112
    %v115 = vadd.f32 %v105, %v113
    %v116 = vsub.f32 %v100, %v114
    %v117 = vsub.f32 %v101, %v115
    %v118 = vadd.f32 %v92, %v114
    %v119 = vadd.f32 %v93, %v115
    %v120 = vsel %vm80, %v114, 0.0
    %v121 = vsel %vm81, %v115, 0.0
    %s122 = scalar_lea.vmem [#allocation6], %s56
    %123 = vst [vmem:[%s122] sm:$0xff] %v120
    %124 = vst [vmem:[%s122 + $0x8] sm:$0xff] %v121
    %s125 = sadd.s32 0, 32
    %s126 = scalar_lea.vmem [#allocation3], %s125
    %v127 = vld [vmem:[%s126] sm:$0xff]
    %v128 = vld [vmem:[%s126 + $0x8] sm:$0xff]
    %v129 = vadd.f32 %v116, %v127
    %v130 = vadd.f32 %v117, %v128
    %vm131 = vcmp.ge.f32.partialorder %v129, %v30
    %vm132 = vcmp.ge.f32.partialorder %v130, %v30
    %v133 = vsel %vm131, %v30, 0.0
    %v134 = vsel %vm132, %v30, 0.0
    %vm135 = vcmp.le.f32.partialorder %v129, %v32
    %vm136 = vcmp.le.f32.partialorder %v130, %v32
    %vm137 = vcmp.gt.f32.partialorder %v118, 0.0
    %vm138 = vcmp.gt.f32.partialorder %v119, 0.0
    %vm139 = vmand %vm135, %vm137
    %vm140 = vmand %vm136, %vm138
    %v141 = vsel %vm139, %v32, 0.0
    %v142 = vsel %vm140, %v32, 0.0
    %v143 = vadd.f32 %v133, %v141
    %v144 = vadd.f32 %v134, %v142
    %v145 = vsub.f32 %v129, %v143
    %v146 = vsub.f32 %v130, %v144
    %v147 = vadd.f32 %v118, %v143
    %v148 = vadd.f32 %v119, %v144
    %v149 = vsel %vm80, %v143, 0.0
    %v150 = vsel %vm81, %v144, 0.0
    %s151 = scalar_lea.vmem [#allocation6], %s125
    %152 = vst [vmem:[%s151] sm:$0xff] %v149
    %153 = vst [vmem:[%s151 + $0x8] sm:$0xff] %v150
    %s154 = sadd.s32 0, 48
    %s155 = scalar_lea.vmem [#allocation3], %s154
    %v156 = vld [vmem:[%s155] sm:$0xff]
    %v157 = vld [vmem:[%s155 + $0x8] sm:$0xff]
    %v158 = vadd.f32 %v145, %v156
    %v159 = vadd.f32 %v146, %v157
    %vm160 = vcmp.ge.f32.partialorder %v158, %v30
    %vm161 = vcmp.ge.f32.partialorder %v159, %v30
    %v162 = vsel %vm160, %v30, 0.0
    %v163 = vsel %vm161, %v30, 0.0
    %vm164 = vcmp.le.f32.partialorder %v158, %v32
    %vm165 = vcmp.le.f32.partialorder %v159, %v32
    %vm166 = vcmp.gt.f32.partialorder %v147, 0.0
    %vm167 = vcmp.gt.f32.partialorder %v148, 0.0
    %vm168 = vmand %vm164, %vm166
    %vm169 = vmand %vm165, %vm167
    %v170 = vsel %vm168, %v32, 0.0
    %v171 = vsel %vm169, %v32, 0.0
    %v172 = vadd.f32 %v162, %v170
    %v173 = vadd.f32 %v163, %v171
    %v174 = vsel %vm80, %v172, 0.0
    %v175 = vsel %vm81, %v173, 0.0
    %s176 = scalar_lea.vmem [#allocation6], %s154
    %177 = vst [vmem:[%s176] sm:$0xff] %v174
    %178 = vst [vmem:[%s176 + $0x8] sm:$0xff] %v175
    // Predicated region
    $region14: #{tpu_custom_call.1} parent=1 // pred_check
      _
    $region15: #{tpu_custom_call.1} parent=1 // pred_check_branch
      %180 = sbr.rel (0) target = $region17
    $region16: #{tpu_custom_call.1} parent=1 // pred_region
      %182 = vsyncadd [#allocation5], 0
      %s183 = sshll.u32 [#allocation6], 4
      %s184 = int_to_ptr.vmem [resolvable:$true] %s183
      %s185 = sshll.u32 %s2, 4
      %s186 = int_to_ptr.hbm [resolvable:$true] %s185
      %191 = dma.vmem_to_hbm [thread:$0]  %s184, 1024, %s186, [#allocation5], 128, 128, 8
    $region17: #{tpu_custom_call.1} parent=1 // pred_fallthru
      _
    // Predicated region
    $region18: #{tpu_custom_call.1} parent=1 // pred_check
      _
    $region19: #{tpu_custom_call.1} parent=1 // pred_check_branch
      %193 = sbr.rel (0) target = $region21
    $region20: #{tpu_custom_call.1} parent=1 // pred_region
      %195 = dma.done [#allocation5], 1024
    $region21: #{tpu_custom_call.1} parent=1 // pred_fallthru
      _
    %196 = vsyncpa [#allocation4], 1
    %197 = vsyncpa [#allocation5], 1

</llo_original>
